<compile_context>
chip_gen: v6e
topology: v6e:2x2x1
jax: 0.10.0
libtpu: 0.0.40
codegen_flags: <defaults>
</compile_context>

<pallas_src>
import functools

import jax
import jax.numpy as jnp
from jax.experimental import pallas as pl
from jax.experimental.pallas import tpu as pltpu


def _round_up(x, m):
    return (x + m - 1) // m * m


# ------------------------------------------------------------------ kernel

def gae_fused_kernel(feat_ref, adj_ref, s_ref,
                     w0_ref, b0_ref, w1_ref, b1_ref,
                     dw1_ref, db1_ref, dw2_ref, db2_ref,
                     dw3_ref, db3_ref,
                     out_ref):
    """One output-column tile of the GAE forward, batched over all graphs.

    feat_ref: (B, N, F) f32   adj_ref: (B, N, N) f32
    s_ref   : (B, 1, N) f32   (adj.mean(axis=1), precomputed in the wrapper)
    weights : bf16 (matmul operands); biases f32
    dw3_ref : (256, TILE) bf16   db3_ref: (1, TILE) f32   (this grid step's tile)
    out_ref : (B, TILE) f32
    """
    B, N, F = feat_ref.shape
    H = w0_ref.shape[1]

    feat = feat_ref[...].astype(jnp.bfloat16)
    adj = adj_ref[...].astype(jnp.bfloat16)

    # ---- GCN encoder (batched over graphs) ----
    # Layer 0: one (B*N, F) @ (F, H) MXU push, then batched A @ (X W0).
    xw = jnp.dot(feat.reshape(B * N, F), w0_ref[...],
                 preferred_element_type=jnp.float32).reshape(B, N, H)
    ah = jnp.einsum('bij,bjh->bih', adj, xw.astype(jnp.bfloat16),
                    preferred_element_type=jnp.float32)
    h = jnp.maximum(ah + b0_ref[...], 0.0)                        # (B, N, H) f32

    # Layer 1 with the node-mean hoisted in front of the matmuls:
    #   mean_n(A @ h @ W1 + b1) == (rowmean(A) @ h) @ W1 + b1
    r = jnp.einsum('bqn,bnh->bqh',
                   s_ref[...].astype(jnp.bfloat16),
                   h.astype(jnp.bfloat16),
                   preferred_element_type=jnp.float32)            # (B, 1, H)
    r = r.reshape(B, H)
    z = jnp.dot(r.astype(jnp.bfloat16), w1_ref[...],
                preferred_element_type=jnp.float32) + b1_ref[...]  # (B, D) f32

    # ---- WeightedGraphDecoder MLP (this tile of the N*N output columns) ----
    x1 = jnp.maximum(
        jnp.dot(z.astype(jnp.bfloat16), dw1_ref[...],
                preferred_element_type=jnp.float32) + db1_ref[...], 0.0)
    x2 = jnp.maximum(
        jnp.dot(x1.astype(jnp.bfloat16), dw2_ref[...],
                preferred_element_type=jnp.float32) + db2_ref[...], 0.0)
    out_ref[...] = (
        jnp.dot(x2.astype(jnp.bfloat16), dw3_ref[...],
                preferred_element_type=jnp.float32) + db3_ref[...])


# ------------------------------------------------------ one-time param prep

def prepare_params(params, num_nodes, lane_tile=512):
    """Done ONCE, outside the per-call jit:
       * fold (A + A^T)/2 into fc3's weights/bias (kernel output is symmetric),
       * pad fc3's output columns to a multiple of 128 lanes (unmasked stores),
       * cast matmul-operand weights to bf16 (biases stay f32)."""
    N = num_nodes
    NN = N * N
    w3 = params["dec_w3"]                        # (256, NN)
    b3 = params["dec_b3"]                        # (1,   NN)
    H2 = w3.shape[0]

    w3s = 0.5 * (w3 + jnp.swapaxes(w3.reshape(H2, N, N), 1, 2).reshape(H2, NN))
    b3s = 0.5 * (b3 + jnp.swapaxes(b3.reshape(1, N, N), 1, 2).reshape(1, NN))

    nn_pad = _round_up(NN, 128)
    # largest tile in {lane_tile, 512, 256, 128} that divides nn_pad
    tile = next(t for t in (lane_tile, 512, 256, 128)
                if t <= nn_pad and nn_pad % t == 0)

    w3p = jnp.zeros((H2, nn_pad), jnp.float32).at[:, :NN].set(w3s)
    b3p = jnp.zeros((1, nn_pad), jnp.float32).at[:, :NN].set(b3s)

    prepped = {
        "enc_w0": params["enc_w0"].astype(jnp.bfloat16),
        "enc_b0": params["enc_b0"],
        "enc_w1": params["enc_w1"].astype(jnp.bfloat16),
        "enc_b1": params["enc_b1"],
        "dec_w1": params["dec_w1"].astype(jnp.bfloat16),
        "dec_b1": params["dec_b1"],
        "dec_w2": params["dec_w2"].astype(jnp.bfloat16),
        "dec_b2": params["dec_b2"],
        "dec_w3": w3p.astype(jnp.bfloat16),
        "dec_b3": b3p,
    }
    return prepped, int(nn_pad), int(tile)


# ------------------------------------------------------------------ wrapper

@functools.partial(jax.jit, static_argnames=("num_nodes", "nn_pad", "tile"))
def gae_forward(features, adj, prepped, *, num_nodes, nn_pad, tile):
    B, N, _ = features.shape
    NN = num_nodes * num_nodes

    # Node-mean of adj precomputed here -> kernel's MXU contraction instead of
    # per-graph XLU reductions; the (B,1,N) side input is negligible DMA.
    s = jnp.mean(adj, axis=1, keepdims=True)                       # (B, 1, N)

    num_tiles = nn_pad // tile

    def resident(arr):
        nd = arr.ndim
        return pl.BlockSpec(arr.shape, lambda j: (0,) * nd)

    flat = pl.pallas_call(
        gae_fused_kernel,
        out_shape=jax.ShapeDtypeStruct((B, nn_pad), jnp.float32),
        grid=(num_tiles,),
        in_specs=[
            resident(features),                 # feat   (B, N, F)
            resident(adj),                      # adj    (B, N, N)
            resident(s),                        # s      (B, 1, N)
            resident(prepped["enc_w0"]),
            resident(prepped["enc_b0"]),
            resident(prepped["enc_w1"]),
            resident(prepped["enc_b1"]),
            resident(prepped["dec_w1"]),
            resident(prepped["dec_b1"]),
            resident(prepped["dec_w2"]),
            resident(prepped["dec_b2"]),
            pl.BlockSpec((prepped["dec_w3"].shape[0], tile), lambda j: (0, j)),
            pl.BlockSpec((1, tile), lambda j: (0, j)),
        ],
        out_specs=pl.BlockSpec((B, tile), lambda j: (0, j)),
        compiler_params=pltpu.CompilerParams(
            dimension_semantics=("parallel",)),
    )(features, adj, s,
      prepped["enc_w0"], prepped["enc_b0"],
      prepped["enc_w1"], prepped["enc_b1"],
      prepped["dec_w1"], prepped["dec_b1"],
      prepped["dec_w2"], prepped["dec_b2"],
      prepped["dec_w3"], prepped["dec_b3"])

    # Slice off lane padding; reshape is free XLA glue on the lane-dense slab.
    return flat[:, :NN].reshape(B, num_nodes, num_nodes)


# ---------------------------------------------------------------- reference

def gae_forward_ref(features, adj, params):
    h = jax.nn.relu(adj @ (features @ params["enc_w0"]) + params["enc_b0"])
    zn = adj @ (h @ params["enc_w1"]) + params["enc_b1"]
    z = jnp.mean(zn, axis=1)
    x = jax.nn.relu(z @ params["dec_w1"] + params["dec_b1"])
    x = jax.nn.relu(x @ params["dec_w2"] + params["dec_b2"])
    x = x @ params["dec_w3"] + params["dec_b3"]
    N = adj.shape[1]
    a = x.reshape(-1, N, N)
    return 0.5 * (a + jnp.swapaxes(a, 1, 2))


# --------------------------------------------------------------------- main

def init_params(key, f_in, gcn_hidden, encode_dim, num_nodes):
    ks = jax.random.split(key, 10)

    def linear(kw, kb, fan_in, fan_out):
        bound = 1.0 / jnp.sqrt(fan_in)
        w = jax.random.uniform(kw, (fan_in, fan_out), jnp.float32, -bound, bound)
        b = jax.random.uniform(kb, (1, fan_out), jnp.float32, -bound, bound)
        return w, b

    p = {}
    p["enc_w0"], p["enc_b0"] = linear(ks[0], ks[1], f_in, gcn_hidden)
    p["enc_w1"], p["enc_b1"] = linear(ks[2], ks[3], gcn_hidden, encode_dim)
    p["dec_w1"], p["dec_b1"] = linear(ks[4], ks[5], encode_dim, 128)
    p["dec_w2"], p["dec_b2"] = linear(ks[6], ks[7], 128, 256)
    p["dec_w3"], p["dec_b3"] = linear(ks[8], ks[9], 256, num_nodes * num_nodes)
    return p


if __name__ == "__main__":
    B, N, F_IN = 2, 8, 16
    GCN_HIDDEN, ENCODE_DIM = 32, 32

    key = jax.random.PRNGKey(0)
    k_feat, k_adj, k_par = jax.random.split(key, 3)

    features = jax.random.normal(k_feat, (B, N, F_IN), jnp.float32)
    adj_raw = jax.random.uniform(k_adj, (B, N, N), jnp.float32)
    adj = 0.5 * (adj_raw + jnp.swapaxes(adj_raw, 1, 2))  # symmetric weighted adj

    params = init_params(k_par, F_IN, GCN_HIDDEN, ENCODE_DIM, N)

    # One-time prep (outside the per-call jit): symmetry fold + lane padding
    # + bf16 weight cast.
    prepped, nn_pad, tile = prepare_params(params, N)

    out = gae_forward(features, adj, prepped,
                      num_nodes=N, nn_pad=nn_pad, tile=tile)
    out = jax.block_until_ready(out)

    ref = gae_forward_ref(features, adj, params)
    assert out.shape == (B, N, N)
    # bf16 matmul operands (f32 accumulation) -> loosened tolerance vs f32 ref.
    assert jnp.allclose(out, ref, atol=5e-2, rtol=5e-2), \
        float(jnp.max(jnp.abs(out - ref)))
    assert jnp.allclose(out, jnp.swapaxes(out, 1, 2), atol=1e-5)  # symmetric

    print("KERNEL_OK")
</pallas_src>

<mosaic_0001>
module attributes {stable_mosaic.version = 11 : i64} {
  func.func @gae_fused_kernel(%arg0: i32, %arg1: memref<2x8x16xf32, #tpu.memory_space<vmem>>, %arg2: memref<2x8x8xf32, #tpu.memory_space<vmem>>, %arg3: memref<2x1x8xf32, #tpu.memory_space<vmem>>, %arg4: memref<16x32xbf16, #tpu.memory_space<vmem>>, %arg5: memref<1x32xf32, #tpu.memory_space<vmem>>, %arg6: memref<32x32xbf16, #tpu.memory_space<vmem>>, %arg7: memref<1x32xf32, #tpu.memory_space<vmem>>, %arg8: memref<32x128xbf16, #tpu.memory_space<vmem>>, %arg9: memref<1x128xf32, #tpu.memory_space<vmem>>, %arg10: memref<128x256xbf16, #tpu.memory_space<vmem>>, %arg11: memref<1x256xf32, #tpu.memory_space<vmem>>, %arg12: memref<256x128xbf16, #tpu.memory_space<vmem>>, %arg13: memref<1x128xf32, #tpu.memory_space<vmem>>, %arg14: memref<2x128xf32, #tpu.memory_space<vmem>>) attributes {dimension_semantics = [#tpu.dimension_semantics<parallel>], iteration_bounds = array<i64: 1>, scalar_prefetch = 0 : i64, scratch_operands = 0 : i64, tpu.core_type = #tpu.core_type<tc>, window_params = [{pipeline_mode = #tpu.pipeline_mode<synchronous>, transform_indices = @transform_0, window_bounds = array<i64: 2, 8, 16>}, {pipeline_mode = #tpu.pipeline_mode<synchronous>, transform_indices = @transform_1, window_bounds = array<i64: 2, 8, 8>}, {pipeline_mode = #tpu.pipeline_mode<synchronous>, transform_indices = @transform_2, window_bounds = array<i64: 2, 1, 8>}, {pipeline_mode = #tpu.pipeline_mode<synchronous>, transform_indices = @transform_3, window_bounds = array<i64: 16, 32>}, {pipeline_mode = #tpu.pipeline_mode<synchronous>, transform_indices = @transform_4, window_bounds = array<i64: 1, 32>}, {pipeline_mode = #tpu.pipeline_mode<synchronous>, transform_indices = @transform_5, window_bounds = array<i64: 32, 32>}, {pipeline_mode = #tpu.pipeline_mode<synchronous>, transform_indices = @transform_6, window_bounds = array<i64: 1, 32>}, {pipeline_mode = #tpu.pipeline_mode<synchronous>, transform_indices = @transform_7, window_bounds = array<i64: 32, 128>}, {pipeline_mode = #tpu.pipeline_mode<synchronous>, transform_indices = @transform_8, window_bounds = array<i64: 1, 128>}, {pipeline_mode = #tpu.pipeline_mode<synchronous>, transform_indices = @transform_9, window_bounds = array<i64: 128, 256>}, {pipeline_mode = #tpu.pipeline_mode<synchronous>, transform_indices = @transform_10, window_bounds = array<i64: 1, 256>}, {transform_indices = @transform_11, window_bounds = array<i64: 256, 128>}, {transform_indices = @transform_12, window_bounds = array<i64: 1, 128>}, {transform_indices = @transform_13, window_bounds = array<i64: 2, 128>}]} {
    %c0 = arith.constant 0 : index
    %c0_0 = arith.constant 0 : index
    %c0_1 = arith.constant 0 : index
    %0 = vector.load %arg1[%c0, %c0_0, %c0_1] : memref<2x8x16xf32, #tpu.memory_space<vmem>>, vector<2x8x16xf32>
    %1 = arith.truncf %0 : vector<2x8x16xf32> to vector<2x8x16xbf16>
    %c0_2 = arith.constant 0 : index
    %c0_3 = arith.constant 0 : index
    %c0_4 = arith.constant 0 : index
    %2 = vector.load %arg2[%c0_2, %c0_3, %c0_4] : memref<2x8x8xf32, #tpu.memory_space<vmem>>, vector<2x8x8xf32>
    %3 = arith.truncf %2 : vector<2x8x8xf32> to vector<2x8x8xbf16>
    %4 = vector.shape_cast %1 : vector<2x8x16xbf16> to vector<16x16xbf16>
    %c0_5 = arith.constant 0 : index
    %c0_6 = arith.constant 0 : index
    %5 = vector.load %arg4[%c0_5, %c0_6] : memref<16x32xbf16, #tpu.memory_space<vmem>>, vector<16x32xbf16>
    %cst = arith.constant dense<0.000000e+00> : vector<16x32xf32>
    %6 = tpu.matmul %4, %5, %cst {dimension_numbers = #tpu.dot_dimension_numbers<[1], [0], [0], [1], [0, 0, 1, 1], [], []>} : vector<16x16xbf16>, vector<16x32xbf16>, vector<16x32xf32> -> vector<16x32xf32>
    %7 = vector.shape_cast %6 : vector<16x32xf32> to vector<2x8x32xf32>
    %8 = arith.truncf %7 : vector<2x8x32xf32> to vector<2x8x32xbf16>
    "tpu.trace_start"() <{level = 10 : i32, message = "bij,bjh->bih"}> : () -> ()
    %cst_7 = arith.constant dense<0.000000e+00> : vector<2x8x32xf32>
    %9 = tpu.matmul %3, %8, %cst_7 {dimension_numbers = #tpu.dot_dimension_numbers<[2], [1], [1], [2], [0, 0, 0, 1, 1, 2], [0], [0]>} : vector<2x8x8xbf16>, vector<2x8x32xbf16>, vector<2x8x32xf32> -> vector<2x8x32xf32>
    "tpu.trace_stop"() : () -> ()
    %c0_8 = arith.constant 0 : index
    %c0_9 = arith.constant 0 : index
    %10 = vector.load %arg5[%c0_8, %c0_9] : memref<1x32xf32, #tpu.memory_space<vmem>>, vector<1x32xf32>
    %11 = vector.shape_cast %10 : vector<1x32xf32> to vector<1x1x32xf32>
    %12 = vector.broadcast %11 : vector<1x1x32xf32> to vector<2x8x32xf32>
    %13 = arith.addf %9, %12 : vector<2x8x32xf32>
    %cst_10 = arith.constant 0.000000e+00 : f32
    %14 = vector.broadcast %cst_10 : f32 to vector<2x8x32xf32>
    %15 = arith.maximumf %13, %14 : vector<2x8x32xf32>
    %c0_11 = arith.constant 0 : index
    %c0_12 = arith.constant 0 : index
    %c0_13 = arith.constant 0 : index
    %16 = vector.load %arg3[%c0_11, %c0_12, %c0_13] : memref<2x1x8xf32, #tpu.memory_space<vmem>>, vector<2x1x8xf32>
    %17 = arith.truncf %16 : vector<2x1x8xf32> to vector<2x1x8xbf16>
    %18 = arith.truncf %15 : vector<2x8x32xf32> to vector<2x8x32xbf16>
    "tpu.trace_start"() <{level = 10 : i32, message = "bqn,bnh->bqh"}> : () -> ()
    %cst_14 = arith.constant dense<0.000000e+00> : vector<2x1x32xf32>
    %19 = tpu.matmul %17, %18, %cst_14 {dimension_numbers = #tpu.dot_dimension_numbers<[2], [1], [1], [2], [0, 0, 0, 1, 1, 2], [0], [0]>} : vector<2x1x8xbf16>, vector<2x8x32xbf16>, vector<2x1x32xf32> -> vector<2x1x32xf32>
    "tpu.trace_stop"() : () -> ()
    %20 = vector.shape_cast %19 : vector<2x1x32xf32> to vector<2x32xf32>
    %21 = arith.truncf %20 : vector<2x32xf32> to vector<2x32xbf16>
    %c0_15 = arith.constant 0 : index
    %c0_16 = arith.constant 0 : index
    %22 = vector.load %arg6[%c0_15, %c0_16] : memref<32x32xbf16, #tpu.memory_space<vmem>>, vector<32x32xbf16>
    %cst_17 = arith.constant dense<0.000000e+00> : vector<2x32xf32>
    %23 = tpu.matmul %21, %22, %cst_17 {dimension_numbers = #tpu.dot_dimension_numbers<[1], [0], [0], [1], [0, 0, 1, 1], [], []>} : vector<2x32xbf16>, vector<32x32xbf16>, vector<2x32xf32> -> vector<2x32xf32>
    %c0_18 = arith.constant 0 : index
    %c0_19 = arith.constant 0 : index
    %24 = vector.load %arg7[%c0_18, %c0_19] : memref<1x32xf32, #tpu.memory_space<vmem>>, vector<1x32xf32>
    %25 = vector.broadcast %24 : vector<1x32xf32> to vector<2x32xf32>
    %26 = arith.addf %23, %25 : vector<2x32xf32>
    %27 = arith.truncf %26 : vector<2x32xf32> to vector<2x32xbf16>
    %c0_20 = arith.constant 0 : index
    %c0_21 = arith.constant 0 : index
    %28 = vector.load %arg8[%c0_20, %c0_21] : memref<32x128xbf16, #tpu.memory_space<vmem>>, vector<32x128xbf16>
    %cst_22 = arith.constant dense<0.000000e+00> : vector<2x128xf32>
    %29 = tpu.matmul %27, %28, %cst_22 {dimension_numbers = #tpu.dot_dimension_numbers<[1], [0], [0], [1], [0, 0, 1, 1], [], []>} : vector<2x32xbf16>, vector<32x128xbf16>, vector<2x128xf32> -> vector<2x128xf32>
    %c0_23 = arith.constant 0 : index
    %c0_24 = arith.constant 0 : index
    %30 = vector.load %arg9[%c0_23, %c0_24] : memref<1x128xf32, #tpu.memory_space<vmem>>, vector<1x128xf32>
    %31 = vector.broadcast %30 : vector<1x128xf32> to vector<2x128xf32>
    %32 = arith.addf %29, %31 : vector<2x128xf32>
    %cst_25 = arith.constant 0.000000e+00 : f32
    %33 = vector.broadcast %cst_25 : f32 to vector<2x128xf32>
    %34 = arith.maximumf %32, %33 : vector<2x128xf32>
    %35 = arith.truncf %34 : vector<2x128xf32> to vector<2x128xbf16>
    %c0_26 = arith.constant 0 : index
    %c0_27 = arith.constant 0 : index
    %36 = vector.load %arg10[%c0_26, %c0_27] : memref<128x256xbf16, #tpu.memory_space<vmem>>, vector<128x256xbf16>
    %cst_28 = arith.constant dense<0.000000e+00> : vector<2x256xf32>
    %37 = tpu.matmul %35, %36, %cst_28 {dimension_numbers = #tpu.dot_dimension_numbers<[1], [0], [0], [1], [0, 0, 1, 1], [], []>} : vector<2x128xbf16>, vector<128x256xbf16>, vector<2x256xf32> -> vector<2x256xf32>
    %c0_29 = arith.constant 0 : index
    %c0_30 = arith.constant 0 : index
    %38 = vector.load %arg11[%c0_29, %c0_30] : memref<1x256xf32, #tpu.memory_space<vmem>>, vector<1x256xf32>
    %39 = vector.broadcast %38 : vector<1x256xf32> to vector<2x256xf32>
    %40 = arith.addf %37, %39 : vector<2x256xf32>
    %cst_31 = arith.constant 0.000000e+00 : f32
    %41 = vector.broadcast %cst_31 : f32 to vector<2x256xf32>
    %42 = arith.maximumf %40, %41 : vector<2x256xf32>
    %43 = arith.truncf %42 : vector<2x256xf32> to vector<2x256xbf16>
    %c0_32 = arith.constant 0 : index
    %c0_33 = arith.constant 0 : index
    %44 = vector.load %arg12[%c0_32, %c0_33] : memref<256x128xbf16, #tpu.memory_space<vmem>>, vector<256x128xbf16>
    %cst_34 = arith.constant dense<0.000000e+00> : vector<2x128xf32>
    %45 = tpu.matmul %43, %44, %cst_34 {dimension_numbers = #tpu.dot_dimension_numbers<[1], [0], [0], [1], [0, 0, 1, 1], [], []>} : vector<2x256xbf16>, vector<256x128xbf16>, vector<2x128xf32> -> vector<2x128xf32>
    %c0_35 = arith.constant 0 : index
    %c0_36 = arith.constant 0 : index
    %46 = vector.load %arg13[%c0_35, %c0_36] : memref<1x128xf32, #tpu.memory_space<vmem>>, vector<1x128xf32>
    %47 = vector.broadcast %46 : vector<1x128xf32> to vector<2x128xf32>
    %48 = arith.addf %45, %47 : vector<2x128xf32>
    %c0_37 = arith.constant 0 : index
    %c0_38 = arith.constant 0 : index
    %49 = vector.load %arg14[%c0_37, %c0_38] : memref<2x128xf32, #tpu.memory_space<vmem>>, vector<2x128xf32>
    tpu.vector_store %arg14[%c0_37, %c0_38], %48 {strides = array<i32>} : memref<2x128xf32, #tpu.memory_space<vmem>>, vector<2x128xf32>,
    return
  }
  func.func @transform_0(%arg0: i32) -> (i32, i32, i32) {
    %c0_i32 = arith.constant 0 : i32
    %c0_i32_0 = arith.constant 0 : i32
    %c0_i32_1 = arith.constant 0 : i32
    %c0_i32_2 = arith.constant 0 : i32
    return %c0_i32, %c0_i32_0, %c0_i32_1 : i32, i32, i32
  }
  func.func @transform_1(%arg0: i32) -> (i32, i32, i32) {
    %c0_i32 = arith.constant 0 : i32
    %c0_i32_0 = arith.constant 0 : i32
    %c0_i32_1 = arith.constant 0 : i32
    %c0_i32_2 = arith.constant 0 : i32
    return %c0_i32, %c0_i32_0, %c0_i32_1 : i32, i32, i32
  }
  func.func @transform_2(%arg0: i32) -> (i32, i32, i32) {
    %c0_i32 = arith.constant 0 : i32
    %c0_i32_0 = arith.constant 0 : i32
    %c0_i32_1 = arith.constant 0 : i32
    %c0_i32_2 = arith.constant 0 : i32
    return %c0_i32, %c0_i32_0, %c0_i32_1 : i32, i32, i32
  }
  func.func @transform_3(%arg0: i32) -> (i32, i32) {
    %c0_i32 = arith.constant 0 : i32
    %c0_i32_0 = arith.constant 0 : i32
    %c0_i32_1 = arith.constant 0 : i32
    return %c0_i32, %c0_i32_0 : i32, i32
  }
  func.func @transform_4(%arg0: i32) -> (i32, i32) {
    %c0_i32 = arith.constant 0 : i32
    %c0_i32_0 = arith.constant 0 : i32
    %c0_i32_1 = arith.constant 0 : i32
    return %c0_i32, %c0_i32_0 : i32, i32
  }
  func.func @transform_5(%arg0: i32) -> (i32, i32) {
    %c0_i32 = arith.constant 0 : i32
    %c0_i32_0 = arith.constant 0 : i32
    %c0_i32_1 = arith.constant 0 : i32
    return %c0_i32, %c0_i32_0 : i32, i32
  }
  func.func @transform_6(%arg0: i32) -> (i32, i32) {
    %c0_i32 = arith.constant 0 : i32
    %c0_i32_0 = arith.constant 0 : i32
    %c0_i32_1 = arith.constant 0 : i32
    return %c0_i32, %c0_i32_0 : i32, i32
  }
  func.func @transform_7(%arg0: i32) -> (i32, i32) {
    %c0_i32 = arith.constant 0 : i32
    %c0_i32_0 = arith.constant 0 : i32
    %c0_i32_1 = arith.constant 0 : i32
    return %c0_i32, %c0_i32_0 : i32, i32
  }
  func.func @transform_8(%arg0: i32) -> (i32, i32) {
    %c0_i32 = arith.constant 0 : i32
    %c0_i32_0 = arith.constant 0 : i32
    %c0_i32_1 = arith.constant 0 : i32
    return %c0_i32, %c0_i32_0 : i32, i32
  }
  func.func @transform_9(%arg0: i32) -> (i32, i32) {
    %c0_i32 = arith.constant 0 : i32
    %c0_i32_0 = arith.constant 0 : i32
    %c0_i32_1 = arith.constant 0 : i32
    return %c0_i32, %c0_i32_0 : i32, i32
  }
  func.func @transform_10(%arg0: i32) -> (i32, i32) {
    %c0_i32 = arith.constant 0 : i32
    %c0_i32_0 = arith.constant 0 : i32
    %c0_i32_1 = arith.constant 0 : i32
    return %c0_i32, %c0_i32_0 : i32, i32
  }
  func.func @transform_11(%arg0: i32) -> (i32, i32) {
    %c0_i32 = arith.constant 0 : i32
    %c0_i32_0 = arith.constant 0 : i32
    return %c0_i32, %arg0 : i32, i32
  }
  func.func @transform_12(%arg0: i32) -> (i32, i32) {
    %c0_i32 = arith.constant 0 : i32
    %c0_i32_0 = arith.constant 0 : i32
    return %c0_i32, %arg0 : i32, i32
  }
  func.func @transform_13(%arg0: i32) -> (i32, i32) {
    %c0_i32 = arith.constant 0 : i32
    %c0_i32_0 = arith.constant 0 : i32
    return %c0_i32, %arg0 : i32, i32
  }
}

</mosaic_0001>

<llo_original>
// kernel: gae_forward.1
$region0: #{gae_forward.1}
  #allocation0 [shape = 'u32[]', space=smem, size = 0x4, offset = 0x4, fixed_abs, tag = 'smem constant byte address 0x4 - core index']
  #allocation1 [shape = 'u32[144,128]{1,0:T(1,128)}', space=vmem, size = 0x12000, scoped, tag = 'internal scratch']
  %s0 = inlined_call_operand.vmem [shape: f32[2,8,16], index: 0, kind: input, shape index: {}]
  %s1 = inlined_call_operand.vmem [shape: f32[2,8,8], index: 1, kind: input, shape index: {}]
  %s2 = inlined_call_operand.vmem [shape: f32[2,1,8], index: 2, kind: input, shape index: {}]
  %s3 = inlined_call_operand.vmem [shape: bf16[16,32], index: 3, kind: input, shape index: {}]
  %s4 = inlined_call_operand.vmem [shape: f32[1,32], index: 4, kind: input, shape index: {}]
  %s5 = inlined_call_operand.hbm [shape: bf16[32,32], index: 5, kind: input, shape index: {}]
  %s6 = inlined_call_operand.vmem [shape: f32[1,32], index: 6, kind: input, shape index: {}]
  %s7 = inlined_call_operand.hbm [shape: bf16[32,128], index: 7, kind: input, shape index: {}]
  %s8 = inlined_call_operand.hbm [shape: f32[1,128], index: 8, kind: input, shape index: {}]
  %s9 = inlined_call_operand.hbm [shape: bf16[128,256], index: 9, kind: input, shape index: {}]
  %s10 = inlined_call_operand.vmem [shape: f32[1,256], index: 10, kind: input, shape index: {}]
  %s11 = inlined_call_operand.hbm [shape: bf16[256,128], index: 11, kind: input, shape index: {}]
  %s12 = inlined_call_operand.hbm [shape: f32[1,128], index: 12, kind: input, shape index: {}]
  %s13 = inlined_call_operand.vmem [shape: f32[2,128], index: 13, kind: output, shape index: {}]
  %s14 = sld [smem:[#allocation0]]
  $region86: #{gae_forward.1} parent=0
    _
  %s16 = ssub.s32 1, %s14
  %s17 = scalar_select 0, %s16, %s14
  $region1: #{gae_forward.1} parent=0
    #allocation2 [shape = 'u8[8192]{0}', space=vmem, size = 0x2000, scoped, tag = 'input window, operand 5, single buffered']
    #allocation3 [shape = 's32[1]{0}', space=sflag, size = 0x4, scoped, tag = 'scoped memory for gae_forward.1']
    #allocation4 [shape = 'u8[8192]{0}', space=vmem, size = 0x2000, scoped, tag = 'input window, operand 7, single buffered']
    #allocation5 [shape = 's32[1]{0}', space=sflag, size = 0x4, scoped, tag = 'scoped memory for gae_forward.1']
    #allocation6 [shape = 'u8[512]{0}', space=vmem, size = 0x400, scoped, tag = 'input window, operand 8, single buffered']
    #allocation7 [shape = 'u8[65536]{0}', space=vmem, size = 0x10000, scoped, tag = 'input window, operand 9, single buffered']
    #allocation8 [shape = 's32[1]{0}', space=sflag, size = 0x4, scoped, tag = 'scoped memory for gae_forward.1']
    #allocation9 [shape = 'u8[65536]{0}', space=vmem, size = 0x10000, scoped, tag = 'input window, operand 11, single buffered']
    #allocation10 [shape = 'u8[512]{0}', space=vmem, size = 0x400, scoped, tag = 'input window, operand 12, single buffered']
    #allocation11 [shape = 's32[1]{0}', space=sflag, size = 0x4, scoped, tag = 'scoped memory for gae_forward.1']
    %18 = vsyncpa [#allocation3], 0
    %19 = vsyncpa [#allocation5], 0
    %20 = vsyncpa [#allocation8], 0
    %21 = vsyncpa [#allocation11], 0
    // Predicated region
    $region2: #{gae_forward.1} parent=1 // pred_check
      _
    $region3: #{gae_forward.1} parent=1 // pred_check_branch
      %23 = sbr.rel (0) target = $region5
    $region4: #{gae_forward.1} parent=1 // pred_region
      _
    $region5: #{gae_forward.1} parent=1 // pred_fallthru
      _
    // Predicated region
    $region6: #{gae_forward.1} parent=1 // pred_check
      _
    $region7: #{gae_forward.1} parent=1 // pred_check_branch
      %25 = sbr.rel (0) target = $region9
    $region8: #{gae_forward.1} parent=1 // pred_region
      _
    $region9: #{gae_forward.1} parent=1 // pred_fallthru
      _
    // Predicated region
    $region10: #{gae_forward.1} parent=1 // pred_check
      _
    $region11: #{gae_forward.1} parent=1 // pred_check_branch
      %27 = sbr.rel (0) target = $region13
    $region12: #{gae_forward.1} parent=1 // pred_region
      _
    $region13: #{gae_forward.1} parent=1 // pred_fallthru
      _
    // Predicated region
    $region14: #{gae_forward.1} parent=1 // pred_check
      _
    $region15: #{gae_forward.1} parent=1 // pred_check_branch
      %29 = sbr.rel (0) target = $region17
    $region16: #{gae_forward.1} parent=1 // pred_region
      _
    $region17: #{gae_forward.1} parent=1 // pred_fallthru
      _
    // Predicated region
    $region18: #{gae_forward.1} parent=1 // pred_check
      _
    $region19: #{gae_forward.1} parent=1 // pred_check_branch
      %31 = sbr.rel (0) target = $region21
    $region20: #{gae_forward.1} parent=1 // pred_region
      _
    $region21: #{gae_forward.1} parent=1 // pred_fallthru
      _
    // Predicated region
    $region22: #{gae_forward.1} parent=1 // pred_check
      _
    $region23: #{gae_forward.1} parent=1 // pred_check_branch
      %33 = sbr.rel (0) target = $region25
    $region24: #{gae_forward.1} parent=1 // pred_region
      %s35 = ssub.s32 256, 256
      %36 = vsyncadd [#allocation3], %s35
      %s37 = sshll.u32 [#allocation2], 4
      %s38 = int_to_ptr.vmem [resolvable:$true] %s37
      %43 = dma.hbm_to_vmem [thread:$0]  %s5, 256, %s38, [#allocation3], 64, 64, 4
    $region25: #{gae_forward.1} parent=1 // pred_fallthru
      _
    // Predicated region
    $region26: #{gae_forward.1} parent=1 // pred_check
      _
    $region27: #{gae_forward.1} parent=1 // pred_check_branch
      %45 = sbr.rel (0) target = $region29
    $region28: #{gae_forward.1} parent=1 // pred_region
      _
    $region29: #{gae_forward.1} parent=1 // pred_fallthru
      _
    // Predicated region
    $region30: #{gae_forward.1} parent=1 // pred_check
      _
    $region31: #{gae_forward.1} parent=1 // pred_check_branch
      %47 = sbr.rel (0) target = $region33
    $region32: #{gae_forward.1} parent=1 // pred_region
      %s49 = ssub.s32 256, 256
      %50 = vsyncadd [#allocation5], %s49
      %s51 = sshll.u32 [#allocation4], 4
      %s52 = int_to_ptr.vmem [resolvable:$true] %s51
      %57 = dma.hbm_to_vmem [thread:$0]  %s7, 256, %s52, [#allocation5], 64, 64, 4
    $region33: #{gae_forward.1} parent=1 // pred_fallthru
      _
    // Predicated region
    $region34: #{gae_forward.1} parent=1 // pred_check
      _
    $region35: #{gae_forward.1} parent=1 // pred_check_branch
      %59 = sbr.rel (0) target = $region37
    $region36: #{gae_forward.1} parent=1 // pred_region
      %s61 = ssub.s32 16, 16
      %62 = vsyncadd [#allocation5], %s61
      %s64 = sshll.u32 [#allocation6], 4
      %s65 = int_to_ptr.vmem [resolvable:$true] %s64
      %67 = dma.hbm_to_vmem [thread:$0]  %s8, 16, %s65, [#allocation5]
    $region37: #{gae_forward.1} parent=1 // pred_fallthru
      _
    // Predicated region
    $region38: #{gae_forward.1} parent=1 // pred_check
      _
    $region39: #{gae_forward.1} parent=1 // pred_check_branch
      %69 = sbr.rel (0) target = $region41
    $region40: #{gae_forward.1} parent=1 // pred_region
      %s71 = ssub.s32 2048, 2048
      %72 = vsyncadd [#allocation8], %s71
      %s73 = sshll.u32 [#allocation7], 4
      %s74 = int_to_ptr.vmem [resolvable:$true] %s73
      %79 = dma.hbm_to_vmem [thread:$0]  %s9, 2048, %s74, [#allocation8], 128, 128, 8
    $region41: #{gae_forward.1} parent=1 // pred_fallthru
      _
    // Predicated region
    $region42: #{gae_forward.1} parent=1 // pred_check
      _
    $region43: #{gae_forward.1} parent=1 // pred_check_branch
      %81 = sbr.rel (0) target = $region45
    $region44: #{gae_forward.1} parent=1 // pred_region
      _
    $region45: #{gae_forward.1} parent=1 // pred_fallthru
      _
    // Predicated region
    $region46: #{gae_forward.1} parent=1 // pred_check
      _
    $region47: #{gae_forward.1} parent=1 // pred_check_branch
      %83 = sbr.rel (0) target = $region49
    $region48: #{gae_forward.1} parent=1 // pred_region
      %s85 = ssub.s32 2048, 2048
      %86 = vsyncadd [#allocation8], %s85
      %s87 = sshll.u32 [#allocation9], 4
      %s88 = int_to_ptr.vmem [resolvable:$true] %s87
      %93 = dma.hbm_to_vmem [thread:$0]  %s11, 2048, %s88, [#allocation8], 64, 64, 4
    $region49: #{gae_forward.1} parent=1 // pred_fallthru
      _
    // Predicated region
    $region50: #{gae_forward.1} parent=1 // pred_check
      _
    $region51: #{gae_forward.1} parent=1 // pred_check_branch
      %95 = sbr.rel (0) target = $region53
    $region52: #{gae_forward.1} parent=1 // pred_region
      %s97 = ssub.s32 16, 16
      %98 = vsyncadd [#allocation11], %s97
      %s100 = sshll.u32 [#allocation10], 4
      %s101 = int_to_ptr.vmem [resolvable:$true] %s100
      %103 = dma.hbm_to_vmem [thread:$0]  %s12, 16, %s101, [#allocation11]
    $region53: #{gae_forward.1} parent=1 // pred_fallthru
      _
    // Predicated region
    $region54: #{gae_forward.1} parent=1 // pred_check
      _
    $region55: #{gae_forward.1} parent=1 // pred_check_branch
      %105 = sbr.rel (0) target = $region57
    $region56: #{gae_forward.1} parent=1 // pred_region
      %106 = dma.done [#allocation3], 256
    $region57: #{gae_forward.1} parent=1 // pred_fallthru
      _
    // Predicated region
    $region58: #{gae_forward.1} parent=1 // pred_check
      _
    $region59: #{gae_forward.1} parent=1 // pred_check_branch
      %108 = sbr.rel (0) target = $region61
    $region60: #{gae_forward.1} parent=1 // pred_region
      %109 = dma.done [#allocation5], 256
    $region61: #{gae_forward.1} parent=1 // pred_fallthru
      _
    // Predicated region
    $region62: #{gae_forward.1} parent=1 // pred_check
      _
    $region63: #{gae_forward.1} parent=1 // pred_check_branch
      %111 = sbr.rel (0) target = $region65
    $region64: #{gae_forward.1} parent=1 // pred_region
      %112 = dma.done [#allocation5], 16
    $region65: #{gae_forward.1} parent=1 // pred_fallthru
      _
    // Predicated region
    $region66: #{gae_forward.1} parent=1 // pred_check
      _
    $region67: #{gae_forward.1} parent=1 // pred_check_branch
      %114 = sbr.rel (0) target = $region69
    $region68: #{gae_forward.1} parent=1 // pred_region
      %115 = dma.done [#allocation8], 2048
    $region69: #{gae_forward.1} parent=1 // pred_fallthru
      _
    // Predicated region
    $region70: #{gae_forward.1} parent=1 // pred_check
      _
    $region71: #{gae_forward.1} parent=1 // pred_check_branch
      %117 = sbr.rel (0) target = $region73
    $region72: #{gae_forward.1} parent=1 // pred_region
      %118 = dma.done [#allocation8], 2048
    $region73: #{gae_forward.1} parent=1 // pred_fallthru
      _
    // Predicated region
    $region74: #{gae_forward.1} parent=1 // pred_check
      _
    $region75: #{gae_forward.1} parent=1 // pred_check_branch
      %120 = sbr.rel (0) target = $region77
    $region76: #{gae_forward.1} parent=1 // pred_region
      %121 = dma.done [#allocation11], 16
    $region77: #{gae_forward.1} parent=1 // pred_fallthru
      _
    %v123 = vld [vmem:[%s0] sm:$0xff]
    %v124 = vld [vmem:[%s0 + $0x8] sm:$0xff]
    %v125 = vpack.c.bf16 %v123, %v123
    %v126 = vpack.c.bf16 %v124, %v124
    %v127 = vld [vmem:[%s1] sm:$0xff]
    %v128 = vld [vmem:[%s1 + $0x8] sm:$0xff]
    %v129 = vpack.c.bf16 %v127, %v127
    %v130 = vpack.c.bf16 %v128, %v128
    %v131 = vld [vmem:[%s3] sm:$0xf]
    %v132 = vld [vmem:[%s3 + $0x4] sm:$0xf]
    %v135 = vunpack.c.l.b16 %v125
    %v136 = vunpack.c.l.b16 %v126
    %v137 = vpack.c.b16 %v136, %v135
    %v140 = vunpack.c.l.b16 %v131
    %v141 = vunpack.c.l.b16 %v132
    %v142 = vpack.c.b16 %v141, %v140
    %vm144 = vcmask 130048
    %v146 = vsel %vm144, %v137, 0
    %148 = vmatprep.subr.bf16.mxu0 0
    %149 = vmatpush1.bf16.msra.mxu0 0
    %150 = vmatprep.subr.bf16.mxu0 0
    %151 = vmatpush1.bf16.msra.mxu0 0
    %152 = vmatprep.subr.bf16.mxu0 0
    %153 = vmatpush1.bf16.msra.mxu0 0
    %154 = vmatprep.subr.bf16.mxu0 0
    %155 = vmatpush1.bf16.msra.mxu0 0
    %156 = vmatprep.subr.bf16.mxu0 0
    %157 = vmatpush1.bf16.msra.mxu0 0
    %158 = vmatprep.subr.bf16.mxu0 0
    %159 = vmatpush1.bf16.msra.mxu0 0
    %160 = vmatprep.subr.bf16.mxu0 0
    %161 = vmatpush1.bf16.msra.mxu0 0
    %162 = vmatprep.subr.bf16.mxu0 0
    %163 = vmatpush1.bf16.msra.mxu0 %v142
    %164 = vmatprep.subr.bf16.mxu0 0
    %165 = vmatpush2.bf16.msra.mxu0 0
    %166 = vmatprep.subr.bf16.mxu0 0
    %167 = vmatpush2.bf16.msra.mxu0 0
    %168 = vmatprep.subr.bf16.mxu0 0
    %169 = vmatpush2.bf16.msra.mxu0 0
    %170 = vmatprep.subr.bf16.mxu0 0
    %171 = vmatpush2.bf16.msra.mxu0 0
    %172 = vmatprep.subr.bf16.mxu0 0
    %173 = vmatpush2.bf16.msra.mxu0 0
    %174 = vmatprep.subr.bf16.mxu0 0
    %175 = vmatpush2.bf16.msra.mxu0 0
    %176 = vmatprep.subr.bf16.mxu0 0
    %177 = vmatpush2.bf16.msra.mxu0 0
    %178 = vmatprep.subr.bf16.mxu0 0
    %179 = vmatpush2.bf16.msra.mxu0 0
    %180 = vmatprep.mubr.bf16.mxu0 0
    %181 = vmatmul.mubr.bf16.gmra.mxu0 %v146
    %v182 = vpop.f32.mrf.mxu0
    %v183 = vadd.f32 0.0, %v182
    %v184 = vpop.f32.mrf.mxu0
    %v185 = vpop.f32.mrf.mxu0
    %v186 = vadd.f32 0.0, %v185
    %v187 = vpop.f32.mrf.mxu0
    %188 = vdwg.mxu0
    %v189 = vpack.c.bf16 %v183, %v183
    %v190 = vpack.c.bf16 %v186, %v186
    %v191 = vld [vmem:[%s4] sm:$0x1]
    %v193 = vlaneseq
    %v194 = vshrl.u32 %v193, 7
    %v195 = vsub.s32 0, %v194
    %v196 = vrot.slane %v191, %v195
    %vm198 = vcmask 64512
    %v200 = vsel %vm198, %v129, 0
    %vm202 = vcmask 1043456
    %v204 = vsel %vm202, %v189, 0
    %206 = vmatprep.subr.bf16.mxu0 0
    %207 = vmatpush1.bf16.msra.mxu0 0
    %208 = vmatprep.subr.bf16.mxu0 0
    %209 = vmatpush1.bf16.msra.mxu0 0
    %210 = vmatprep.subr.bf16.mxu0 0
    %211 = vmatpush1.bf16.msra.mxu0 0
    %212 = vmatprep.subr.bf16.mxu0 0
    %213 = vmatpush1.bf16.msra.mxu0 0
    %214 = vmatprep.subr.bf16.mxu0 0
    %215 = vmatpush1.bf16.msra.mxu0 0
    %216 = vmatprep.subr.bf16.mxu0 0
    %217 = vmatpush1.bf16.msra.mxu0 0
    %218 = vmatprep.subr.bf16.mxu0 0
    %219 = vmatpush1.bf16.msra.mxu0 0
    %220 = vmatprep.subr.bf16.mxu0 0
    %221 = vmatpush1.bf16.msra.mxu0 %v204
    %222 = vmatprep.subr.bf16.mxu0 0
    %223 = vmatpush2.bf16.msra.mxu0 0
    %224 = vmatprep.subr.bf16.mxu0 0
    %225 = vmatpush2.bf16.msra.mxu0 0
    %226 = vmatprep.subr.bf16.mxu0 0
    %227 = vmatpush2.bf16.msra.mxu0 0
    %228 = vmatprep.subr.bf16.mxu0 0
    %229 = vmatpush2.bf16.msra.mxu0 0
    %230 = vmatprep.subr.bf16.mxu0 0
    %231 = vmatpush2.bf16.msra.mxu0 0
    %232 = vmatprep.subr.bf16.mxu0 0
    %233 = vmatpush2.bf16.msra.mxu0 0
    %234 = vmatprep.subr.bf16.mxu0 0
    %235 = vmatpush2.bf16.msra.mxu0 0
    %236 = vmatprep.subr.bf16.mxu0 0
    %237 = vmatpush2.bf16.msra.mxu0 0
    %238 = vmatprep.mubr.bf16.mxu0 0
    %239 = vmatmul.mubr.bf16.gmra.mxu0 %v200
    %v240 = vpop.f32.mrf.mxu0
    %v241 = vadd.f32 %v196, %v240
    %v242 = vpop.f32.mrf.mxu0
    %v243 = vpop.f32.mrf.mxu0
    %v244 = vpop.f32.mrf.mxu0
    %245 = vdwg.mxu0
    %v247 = vsel %vm198, %v130, 0
    %v250 = vsel %vm202, %v190, 0
    %252 = vmatprep.subr.bf16.mxu0 0
    %253 = vmatpush1.bf16.msra.mxu0 0
    %254 = vmatprep.subr.bf16.mxu0 0
    %255 = vmatpush1.bf16.msra.mxu0 0
    %256 = vmatprep.subr.bf16.mxu0 0
    %257 = vmatpush1.bf16.msra.mxu0 0
    %258 = vmatprep.subr.bf16.mxu0 0
    %259 = vmatpush1.bf16.msra.mxu0 0
    %260 = vmatprep.subr.bf16.mxu0 0
    %261 = vmatpush1.bf16.msra.mxu0 0
    %262 = vmatprep.subr.bf16.mxu0 0
    %263 = vmatpush1.bf16.msra.mxu0 0
    %264 = vmatprep.subr.bf16.mxu0 0
    %265 = vmatpush1.bf16.msra.mxu0 0
    %266 = vmatprep.subr.bf16.mxu0 0
    %267 = vmatpush1.bf16.msra.mxu0 %v250
    %268 = vmatprep.subr.bf16.mxu0 0
    %269 = vmatpush2.bf16.msra.mxu0 0
    %270 = vmatprep.subr.bf16.mxu0 0
    %271 = vmatpush2.bf16.msra.mxu0 0
    %272 = vmatprep.subr.bf16.mxu0 0
    %273 = vmatpush2.bf16.msra.mxu0 0
    %274 = vmatprep.subr.bf16.mxu0 0
    %275 = vmatpush2.bf16.msra.mxu0 0
    %276 = vmatprep.subr.bf16.mxu0 0
    %277 = vmatpush2.bf16.msra.mxu0 0
    %278 = vmatprep.subr.bf16.mxu0 0
    %279 = vmatpush2.bf16.msra.mxu0 0
    %280 = vmatprep.subr.bf16.mxu0 0
    %281 = vmatpush2.bf16.msra.mxu0 0
    %282 = vmatprep.subr.bf16.mxu0 0
    %283 = vmatpush2.bf16.msra.mxu0 0
    %284 = vmatprep.mubr.bf16.mxu0 0
    %285 = vmatmul.mubr.bf16.gmra.mxu0 %v247
    %v286 = vpop.f32.mrf.mxu0
    %v287 = vadd.f32 %v196, %v286
    %v288 = vpop.f32.mrf.mxu0
    %v289 = vpop.f32.mrf.mxu0
    %v290 = vpop.f32.mrf.mxu0
    %291 = vdwg.mxu0
    %v292 = vmax.f32 %v241, 0.0
    %v293 = vmax.f32 %v287, 0.0
    %v294 = vld [vmem:[%s2] sm:$0x1]
    %v295 = vld [vmem:[%s2 + $0x1] sm:$0x1]
    %v296 = vpack.c.bf16 %v294, %v294
    %v297 = vpack.c.bf16 %v295, %v295
    %v298 = vpack.c.bf16 %v292, %v292
    %v299 = vpack.c.bf16 %v293, %v293
    %v301 = vsel %vm198, %v296, 0
    %v304 = vsel %vm202, %v298, 0
    %306 = vmatprep.subr.bf16.mxu0 0
    %307 = vmatpush1.bf16.msra.mxu0 0
    %308 = vmatprep.subr.bf16.mxu0 0
    %309 = vmatpush1.bf16.msra.mxu0 0
    %310 = vmatprep.subr.bf16.mxu0 0
    %311 = vmatpush1.bf16.msra.mxu0 0
    %312 = vmatprep.subr.bf16.mxu0 0
    %313 = vmatpush1.bf16.msra.mxu0 0
    %314 = vmatprep.subr.bf16.mxu0 0
    %315 = vmatpush1.bf16.msra.mxu0 0
    %316 = vmatprep.subr.bf16.mxu0 0
    %317 = vmatpush1.bf16.msra.mxu0 0
    %318 = vmatprep.subr.bf16.mxu0 0
    %319 = vmatpush1.bf16.msra.mxu0 0
    %320 = vmatprep.subr.bf16.mxu0 0
    %321 = vmatpush1.bf16.msra.mxu0 %v304
    %322 = vmatprep.subr.bf16.mxu0 0
    %323 = vmatpush2.bf16.msra.mxu0 0
    %324 = vmatprep.subr.bf16.mxu0 0
    %325 = vmatpush2.bf16.msra.mxu0 0
    %326 = vmatprep.subr.bf16.mxu0 0
    %327 = vmatpush2.bf16.msra.mxu0 0
    %328 = vmatprep.subr.bf16.mxu0 0
    %329 = vmatpush2.bf16.msra.mxu0 0
    %330 = vmatprep.subr.bf16.mxu0 0
    %331 = vmatpush2.bf16.msra.mxu0 0
    %332 = vmatprep.subr.bf16.mxu0 0
    %333 = vmatpush2.bf16.msra.mxu0 0
    %334 = vmatprep.subr.bf16.mxu0 0
    %335 = vmatpush2.bf16.msra.mxu0 0
    %336 = vmatprep.subr.bf16.mxu0 0
    %337 = vmatpush2.bf16.msra.mxu0 0
    %338 = vmatprep.mubr.bf16.mxu0 0
    %339 = vmatmul.mubr.bf16.gmra.mxu0 %v301
    %v340 = vpop.f32.mrf.mxu0
    %v341 = vadd.f32 0.0, %v340
    %v342 = vpop.f32.mrf.mxu0
    %v343 = vpop.f32.mrf.mxu0
    %v344 = vpop.f32.mrf.mxu0
    %345 = vdwg.mxu0
    %v347 = vsel %vm198, %v297, 0
    %v350 = vsel %vm202, %v299, 0
    %352 = vmatprep.subr.bf16.mxu0 0
    %353 = vmatpush1.bf16.msra.mxu0 0
    %354 = vmatprep.subr.bf16.mxu0 0
    %355 = vmatpush1.bf16.msra.mxu0 0
    %356 = vmatprep.subr.bf16.mxu0 0
    %357 = vmatpush1.bf16.msra.mxu0 0
    %358 = vmatprep.subr.bf16.mxu0 0
    %359 = vmatpush1.bf16.msra.mxu0 0
    %360 = vmatprep.subr.bf16.mxu0 0
    %361 = vmatpush1.bf16.msra.mxu0 0
    %362 = vmatprep.subr.bf16.mxu0 0
    %363 = vmatpush1.bf16.msra.mxu0 0
    %364 = vmatprep.subr.bf16.mxu0 0
    %365 = vmatpush1.bf16.msra.mxu0 0
    %366 = vmatprep.subr.bf16.mxu0 0
    %367 = vmatpush1.bf16.msra.mxu0 %v350
    %368 = vmatprep.subr.bf16.mxu0 0
    %369 = vmatpush2.bf16.msra.mxu0 0
    %370 = vmatprep.subr.bf16.mxu0 0
    %371 = vmatpush2.bf16.msra.mxu0 0
    %372 = vmatprep.subr.bf16.mxu0 0
    %373 = vmatpush2.bf16.msra.mxu0 0
    %374 = vmatprep.subr.bf16.mxu0 0
    %375 = vmatpush2.bf16.msra.mxu0 0
    %376 = vmatprep.subr.bf16.mxu0 0
    %377 = vmatpush2.bf16.msra.mxu0 0
    %378 = vmatprep.subr.bf16.mxu0 0
    %379 = vmatpush2.bf16.msra.mxu0 0
    %380 = vmatprep.subr.bf16.mxu0 0
    %381 = vmatpush2.bf16.msra.mxu0 0
    %382 = vmatprep.subr.bf16.mxu0 0
    %383 = vmatpush2.bf16.msra.mxu0 0
    %384 = vmatprep.mubr.bf16.mxu0 0
    %385 = vmatmul.mubr.bf16.gmra.mxu0 %v347
    %v386 = vpop.f32.mrf.mxu0
    %v387 = vadd.f32 0.0, %v386
    %v388 = vpop.f32.mrf.mxu0
    %v389 = vpop.f32.mrf.mxu0
    %v390 = vpop.f32.mrf.mxu0
    %391 = vdwg.mxu0
    %v392 = vpack.c.bf16 %v341, %v341
    %v393 = vpack.c.bf16 %v387, %v387
    %v394 = vld [vmem:[#allocation2] sm:$0xf]
    %v395 = vld [vmem:[#allocation2 + $0x4] sm:$0xf]
    %v396 = vld [vmem:[#allocation2 + $0x8] sm:$0xf]
    %v397 = vld [vmem:[#allocation2 + $0xc] sm:$0xf]
    %v398 = vld [vmem:[%s6] sm:$0x1]
    %v400 = vlaneseq
    %v401 = vshrl.u32 %v400, 7
    %v402 = vsub.s32 0, %v401
    %v403 = vrot.slane %v398, %v402
    %v407 = vunpack.c.l.b16 %v392
    %v408 = vunpack.c.l.b16 %v393
    %v409 = vrot.slane %v408, 7
    %vm410 = vcmask 1041409
    %v411 = vsel %vm410, %v409, %v407
    %v412 = vpack.c.b16 %v411, %v411
    %v417 = vunpack.c.l.b16 %v394
    %v418 = vunpack.c.l.b16 %v395
    %v419 = vunpack.c.l.b16 %v396
    %v420 = vunpack.c.l.b16 %v397
    %v421 = vpack.c.b16 %v418, %v417
    %v422 = vpack.c.b16 %v420, %v419
    %vm425 = vcmask 261120
    %v427 = vsel %vm425, %v412, 0
    %429 = vmatprep.subr.bf16.mxu0 0
    %430 = vmatpush1.bf16.msra.mxu0 0
    %431 = vmatprep.subr.bf16.mxu0 0
    %432 = vmatpush1.bf16.msra.mxu0 0
    %433 = vmatprep.subr.bf16.mxu0 0
    %434 = vmatpush1.bf16.msra.mxu0 0
    %435 = vmatprep.subr.bf16.mxu0 0
    %436 = vmatpush1.bf16.msra.mxu0 0
    %437 = vmatprep.subr.bf16.mxu0 0
    %438 = vmatpush1.bf16.msra.mxu0 0
    %439 = vmatprep.subr.bf16.mxu0 0
    %440 = vmatpush1.bf16.msra.mxu0 0
    %441 = vmatprep.subr.bf16.mxu0 0
    %442 = vmatpush1.bf16.msra.mxu0 %v422
    %443 = vmatprep.subr.bf16.mxu0 0
    %444 = vmatpush1.bf16.msra.mxu0 %v421
    %445 = vmatprep.subr.bf16.mxu0 0
    %446 = vmatpush2.bf16.msra.mxu0 0
    %447 = vmatprep.subr.bf16.mxu0 0
    %448 = vmatpush2.bf16.msra.mxu0 0
    %449 = vmatprep.subr.bf16.mxu0 0
    %450 = vmatpush2.bf16.msra.mxu0 0
    %451 = vmatprep.subr.bf16.mxu0 0
    %452 = vmatpush2.bf16.msra.mxu0 0
    %453 = vmatprep.subr.bf16.mxu0 0
    %454 = vmatpush2.bf16.msra.mxu0 0
    %455 = vmatprep.subr.bf16.mxu0 0
    %456 = vmatpush2.bf16.msra.mxu0 0
    %457 = vmatprep.subr.bf16.mxu0 0
    %458 = vmatpush2.bf16.msra.mxu0 0
    %459 = vmatprep.subr.bf16.mxu0 0
    %460 = vmatpush2.bf16.msra.mxu0 0
    %461 = vmatprep.mubr.bf16.mxu0 0
    %462 = vmatmul.mubr.bf16.gmra.mxu0 %v427
    %v463 = vpop.f32.mrf.mxu0
    %v464 = vadd.f32 %v403, %v463
    %v465 = vpop.f32.mrf.mxu0
    %v466 = vpop.f32.mrf.mxu0
    %v467 = vpop.f32.mrf.mxu0
    %468 = vdwg.mxu0
    %v469 = vpack.c.bf16 %v464, %v464
    %v470 = vld [vmem:[#allocation4] sm:$0xf]
    %v471 = vld [vmem:[#allocation4 + $0x4] sm:$0xf]
    %v472 = vld [vmem:[#allocation4 + $0x8] sm:$0xf]
    %v473 = vld [vmem:[#allocation4 + $0xc] sm:$0xf]
    %v474 = vld [vmem:[#allocation6] sm:$0x1]
    %v476 = vlaneseq
    %v477 = vshrl.u32 %v476, 7
    %v478 = vsub.s32 0, %v477
    %v479 = vrot.slane %v474, %v478
    %v485 = vunpack.c.l.b16 %v470
    %v486 = vunpack.c.l.b16 %v471
    %v487 = vunpack.c.l.b16 %v472
    %v488 = vunpack.c.l.b16 %v473
    %v489 = vpack.c.b16 %v486, %v485
    %v490 = vpack.c.b16 %v488, %v487
    %v494 = vsel %vm425, %v469, 0
    %496 = vmatprep.subr.bf16.mxu0 0
    %497 = vmatpush1.bf16.msra.mxu0 0
    %498 = vmatprep.subr.bf16.mxu0 0
    %499 = vmatpush1.bf16.msra.mxu0 0
    %500 = vmatprep.subr.bf16.mxu0 0
    %501 = vmatpush1.bf16.msra.mxu0 0
    %502 = vmatprep.subr.bf16.mxu0 0
    %503 = vmatpush1.bf16.msra.mxu0 0
    %504 = vmatprep.subr.bf16.mxu0 0
    %505 = vmatpush1.bf16.msra.mxu0 0
    %506 = vmatprep.subr.bf16.mxu0 0
    %507 = vmatpush1.bf16.msra.mxu0 0
    %508 = vmatprep.subr.bf16.mxu0 0
    %509 = vmatpush1.bf16.msra.mxu0 %v490
    %510 = vmatprep.subr.bf16.mxu0 0
    %511 = vmatpush1.bf16.msra.mxu0 %v489
    %512 = vmatprep.subr.bf16.mxu0 0
    %513 = vmatpush2.bf16.msra.mxu0 0
    %514 = vmatprep.subr.bf16.mxu0 0
    %515 = vmatpush2.bf16.msra.mxu0 0
    %516 = vmatprep.subr.bf16.mxu0 0
    %517 = vmatpush2.bf16.msra.mxu0 0
    %518 = vmatprep.subr.bf16.mxu0 0
    %519 = vmatpush2.bf16.msra.mxu0 0
    %520 = vmatprep.subr.bf16.mxu0 0
    %521 = vmatpush2.bf16.msra.mxu0 0
    %522 = vmatprep.subr.bf16.mxu0 0
    %523 = vmatpush2.bf16.msra.mxu0 0
    %524 = vmatprep.subr.bf16.mxu0 0
    %525 = vmatpush2.bf16.msra.mxu0 0
    %526 = vmatprep.subr.bf16.mxu0 0
    %527 = vmatpush2.bf16.msra.mxu0 0
    %528 = vmatprep.mubr.bf16.mxu0 0
    %529 = vmatmul.mubr.bf16.gmra.mxu0 %v494
    %v530 = vpop.f32.mrf.mxu0
    %v531 = vadd.f32 %v479, %v530
    %v532 = vpop.f32.mrf.mxu0
    %v533 = vpop.f32.mrf.mxu0
    %v534 = vpop.f32.mrf.mxu0
    %535 = vdwg.mxu0
    %v536 = vmax.f32 %v531, 0.0
    %v537 = vpack.c.bf16 %v536, %v536
    %v538 = vld [vmem:[#allocation7] sm:$0xff]
    %v539 = vld [vmem:[#allocation7 + $0x8] sm:$0xff]
    %v540 = vld [vmem:[#allocation7 + $0x10] sm:$0xff]
    %v541 = vld [vmem:[#allocation7 + $0x18] sm:$0xff]
    %v542 = vld [vmem:[#allocation7 + $0x20] sm:$0xff]
    %v543 = vld [vmem:[#allocation7 + $0x28] sm:$0xff]
    %v544 = vld [vmem:[#allocation7 + $0x30] sm:$0xff]
    %v545 = vld [vmem:[#allocation7 + $0x38] sm:$0xff]
    %v546 = vld [vmem:[#allocation7 + $0x40] sm:$0xff]
    %v547 = vld [vmem:[#allocation7 + $0x48] sm:$0xff]
    %v548 = vld [vmem:[#allocation7 + $0x50] sm:$0xff]
    %v549 = vld [vmem:[#allocation7 + $0x58] sm:$0xff]
    %v550 = vld [vmem:[#allocation7 + $0x60] sm:$0xff]
    %v551 = vld [vmem:[#allocation7 + $0x68] sm:$0xff]
    %v552 = vld [vmem:[#allocation7 + $0x70] sm:$0xff]
    %v553 = vld [vmem:[#allocation7 + $0x78] sm:$0xff]
    %v554 = vld [vmem:[%s10] sm:$0x3]
    %v556 = vlaneseq
    %v557 = vshrl.u32 %v556, 7
    %v558 = vsub.s32 0, %v557
    %v559 = vrot.slane %v554, %v558
    %v560 = vlaneseq
    %v561 = vshrl.u32 %v560, 7
    %v562 = vsub.s32 1, %v561
    %v563 = vrot.slane %v554, %v562
    %v582 = vunpack.c.l.b16 %v538
    %v583 = vunpack.c.h.b16 %v538
    %v584 = vunpack.c.l.b16 %v539
    %v585 = vunpack.c.h.b16 %v539
    %v586 = vunpack.c.l.b16 %v540
    %v587 = vunpack.c.h.b16 %v540
    %v588 = vunpack.c.l.b16 %v541
    %v589 = vunpack.c.h.b16 %v541
    %v590 = vunpack.c.l.b16 %v542
    %v591 = vunpack.c.h.b16 %v542
    %v592 = vunpack.c.l.b16 %v543
    %v593 = vunpack.c.h.b16 %v543
    %v594 = vunpack.c.l.b16 %v544
    %v595 = vunpack.c.h.b16 %v544
    %v596 = vunpack.c.l.b16 %v545
    %v597 = vunpack.c.h.b16 %v545
    %v598 = vunpack.c.l.b16 %v546
    %v599 = vunpack.c.h.b16 %v546
    %v600 = vunpack.c.l.b16 %v547
    %v601 = vunpack.c.h.b16 %v547
    %v602 = vunpack.c.l.b16 %v548
    %v603 = vunpack.c.h.b16 %v548
    %v604 = vunpack.c.l.b16 %v549
    %v605 = vunpack.c.h.b16 %v549
    %v606 = vunpack.c.l.b16 %v550
    %v607 = vunpack.c.h.b16 %v550
    %v608 = vunpack.c.l.b16 %v551
    %v609 = vunpack.c.h.b16 %v551
    %v610 = vunpack.c.l.b16 %v552
    %v611 = vunpack.c.h.b16 %v552
    %v612 = vunpack.c.l.b16 %v553
    %v613 = vunpack.c.h.b16 %v553
    %v614 = vpack.c.b16 %v584, %v582
    %v615 = vpack.c.b16 %v585, %v583
    %v616 = vpack.c.b16 %v588, %v586
    %v617 = vpack.c.b16 %v589, %v587
    %v618 = vpack.c.b16 %v592, %v590
    %v619 = vpack.c.b16 %v593, %v591
    %v620 = vpack.c.b16 %v596, %v594
    %v621 = vpack.c.b16 %v597, %v595
    %v622 = vpack.c.b16 %v600, %v598
    %v623 = vpack.c.b16 %v601, %v599
    %v624 = vpack.c.b16 %v604, %v602
    %v625 = vpack.c.b16 %v605, %v603
    %v626 = vpack.c.b16 %v608, %v606
    %v627 = vpack.c.b16 %v609, %v607
    %v628 = vpack.c.b16 %v612, %v610
    %v629 = vpack.c.b16 %v613, %v611
    %646 = vmatprep.subr.bf16.mxu0 %v629
    %647 = vmatpush1.bf16.msra.mxu0 %v628
    %648 = vmatprep.subr.bf16.mxu0 %v627
    %649 = vmatpush1.bf16.msra.mxu0 %v626
    %650 = vmatprep.subr.bf16.mxu0 %v625
    %651 = vmatpush1.bf16.msra.mxu0 %v624
    %652 = vmatprep.subr.bf16.mxu0 %v623
    %653 = vmatpush1.bf16.msra.mxu0 %v622
    %654 = vmatprep.subr.bf16.mxu0 %v621
    %655 = vmatpush1.bf16.msra.mxu0 %v620
    %656 = vmatprep.subr.bf16.mxu0 %v619
    %657 = vmatpush1.bf16.msra.mxu0 %v618
    %658 = vmatprep.subr.bf16.mxu0 %v617
    %659 = vmatpush1.bf16.msra.mxu0 %v616
    %660 = vmatprep.subr.bf16.mxu0 %v615
    %661 = vmatpush1.bf16.msra.mxu0 %v614
    %662 = vmatprep.subr.bf16.mxu0 0
    %663 = vmatpush2.bf16.msra.mxu0 0
    %664 = vmatprep.subr.bf16.mxu0 0
    %665 = vmatpush2.bf16.msra.mxu0 0
    %666 = vmatprep.subr.bf16.mxu0 0
    %667 = vmatpush2.bf16.msra.mxu0 0
    %668 = vmatprep.subr.bf16.mxu0 0
    %669 = vmatpush2.bf16.msra.mxu0 0
    %670 = vmatprep.subr.bf16.mxu0 0
    %671 = vmatpush2.bf16.msra.mxu0 0
    %672 = vmatprep.subr.bf16.mxu0 0
    %673 = vmatpush2.bf16.msra.mxu0 0
    %674 = vmatprep.subr.bf16.mxu0 0
    %675 = vmatpush2.bf16.msra.mxu0 0
    %676 = vmatprep.subr.bf16.mxu0 0
    %677 = vmatpush2.bf16.msra.mxu0 0
    %678 = vmatprep.mubr.bf16.mxu0 0
    %679 = vmatmul.mubr.bf16.gmra.mxu0 %v537
    %v680 = vpop.f32.mrf.mxu0
    %v681 = vadd.f32 %v559, %v680
    %v682 = vpop.f32.mrf.mxu0
    %v683 = vadd.f32 %v563, %v682
    %v684 = vpop.f32.mrf.mxu0
    %v685 = vpop.f32.mrf.mxu0
    %686 = vdwg.mxu0
    %v687 = vmax.f32 %v681, 0.0
    %v688 = vmax.f32 %v683, 0.0
    %v689 = vpack.c.bf16 %v687, %v687
    %v690 = vpack.c.bf16 %v688, %v688
    %v691 = vld [vmem:[#allocation9] sm:$0xf]
    %v692 = vld [vmem:[#allocation9 + $0x4] sm:$0xf]
    %v693 = vld [vmem:[#allocation9 + $0x8] sm:$0xf]
    %v694 = vld [vmem:[#allocation9 + $0xc] sm:$0xf]
    %v695 = vld [vmem:[#allocation9 + $0x10] sm:$0xf]
    %v696 = vld [vmem:[#allocation9 + $0x14] sm:$0xf]
    %v697 = vld [vmem:[#allocation9 + $0x18] sm:$0xf]
    %v698 = vld [vmem:[#allocation9 + $0x1c] sm:$0xf]
    %v699 = vld [vmem:[#allocation9 + $0x20] sm:$0xf]
    %v700 = vld [vmem:[#allocation9 + $0x24] sm:$0xf]
    %v701 = vld [vmem:[#allocation9 + $0x28] sm:$0xf]
    %v702 = vld [vmem:[#allocation9 + $0x2c] sm:$0xf]
    %v703 = vld [vmem:[#allocation9 + $0x30] sm:$0xf]
    %v704 = vld [vmem:[#allocation9 + $0x34] sm:$0xf]
    %v705 = vld [vmem:[#allocation9 + $0x38] sm:$0xf]
    %v706 = vld [vmem:[#allocation9 + $0x3c] sm:$0xf]
    %v707 = vld [vmem:[#allocation9 + $0x40] sm:$0xf]
    %v708 = vld [vmem:[#allocation9 + $0x44] sm:$0xf]
    %v709 = vld [vmem:[#allocation9 + $0x48] sm:$0xf]
    %v710 = vld [vmem:[#allocation9 + $0x4c] sm:$0xf]
    %v711 = vld [vmem:[#allocation9 + $0x50] sm:$0xf]
    %v712 = vld [vmem:[#allocation9 + $0x54] sm:$0xf]
    %v713 = vld [vmem:[#allocation9 + $0x58] sm:$0xf]
    %v714 = vld [vmem:[#allocation9 + $0x5c] sm:$0xf]
    %v715 = vld [vmem:[#allocation9 + $0x60] sm:$0xf]
    %v716 = vld [vmem:[#allocation9 + $0x64] sm:$0xf]
    %v717 = vld [vmem:[#allocation9 + $0x68] sm:$0xf]
    %v718 = vld [vmem:[#allocation9 + $0x6c] sm:$0xf]
    %v719 = vld [vmem:[#allocation9 + $0x70] sm:$0xf]
    %v720 = vld [vmem:[#allocation9 + $0x74] sm:$0xf]
    %v721 = vld [vmem:[#allocation9 + $0x78] sm:$0xf]
    %v722 = vld [vmem:[#allocation9 + $0x7c] sm:$0xf]
    %v723 = vld [vmem:[#allocation10] sm:$0x1]
    %v725 = vlaneseq
    %v726 = vshrl.u32 %v725, 7
    %v727 = vsub.s32 0, %v726
    %v728 = vrot.slane %v723, %v727
    %v762 = vunpack.c.l.b16 %v691
    %v763 = vunpack.c.l.b16 %v692
    %v764 = vunpack.c.l.b16 %v693
    %v765 = vunpack.c.l.b16 %v694
    %v766 = vunpack.c.l.b16 %v695
    %v767 = vunpack.c.l.b16 %v696
    %v768 = vunpack.c.l.b16 %v697
    %v769 = vunpack.c.l.b16 %v698
    %v770 = vunpack.c.l.b16 %v699
    %v771 = vunpack.c.l.b16 %v700
    %v772 = vunpack.c.l.b16 %v701
    %v773 = vunpack.c.l.b16 %v702
    %v774 = vunpack.c.l.b16 %v703
    %v775 = vunpack.c.l.b16 %v704
    %v776 = vunpack.c.l.b16 %v705
    %v777 = vunpack.c.l.b16 %v706
    %v778 = vunpack.c.l.b16 %v707
    %v779 = vunpack.c.l.b16 %v708
    %v780 = vunpack.c.l.b16 %v709
    %v781 = vunpack.c.l.b16 %v710
    %v782 = vunpack.c.l.b16 %v711
    %v783 = vunpack.c.l.b16 %v712
    %v784 = vunpack.c.l.b16 %v713
    %v785 = vunpack.c.l.b16 %v714
    %v786 = vunpack.c.l.b16 %v715
    %v787 = vunpack.c.l.b16 %v716
    %v788 = vunpack.c.l.b16 %v717
    %v789 = vunpack.c.l.b16 %v718
    %v790 = vunpack.c.l.b16 %v719
    %v791 = vunpack.c.l.b16 %v720
    %v792 = vunpack.c.l.b16 %v721
    %v793 = vunpack.c.l.b16 %v722
    %v794 = vpack.c.b16 %v763, %v762
    %v795 = vpack.c.b16 %v765, %v764
    %v796 = vpack.c.b16 %v767, %v766
    %v797 = vpack.c.b16 %v769, %v768
    %v798 = vpack.c.b16 %v771, %v770
    %v799 = vpack.c.b16 %v773, %v772
    %v800 = vpack.c.b16 %v775, %v774
    %v801 = vpack.c.b16 %v777, %v776
    %v802 = vpack.c.b16 %v779, %v778
    %v803 = vpack.c.b16 %v781, %v780
    %v804 = vpack.c.b16 %v783, %v782
    %v805 = vpack.c.b16 %v785, %v784
    %v806 = vpack.c.b16 %v787, %v786
    %v807 = vpack.c.b16 %v789, %v788
    %v808 = vpack.c.b16 %v791, %v790
    %v809 = vpack.c.b16 %v793, %v792
    %826 = vmatprep.subr.bf16.mxu0 0
    %827 = vmatpush1.bf16.msra.mxu0 %v801
    %828 = vmatprep.subr.bf16.mxu0 0
    %829 = vmatpush1.bf16.msra.mxu0 %v800
    %830 = vmatprep.subr.bf16.mxu0 0
    %831 = vmatpush1.bf16.msra.mxu0 %v799
    %832 = vmatprep.subr.bf16.mxu0 0
    %833 = vmatpush1.bf16.msra.mxu0 %v798
    %834 = vmatprep.subr.bf16.mxu0 0
    %835 = vmatpush1.bf16.msra.mxu0 %v797
    %836 = vmatprep.subr.bf16.mxu0 0
    %837 = vmatpush1.bf16.msra.mxu0 %v796
    %838 = vmatprep.subr.bf16.mxu0 0
    %839 = vmatpush1.bf16.msra.mxu0 %v795
    %840 = vmatprep.subr.bf16.mxu0 0
    %841 = vmatpush1.bf16.msra.mxu0 %v794
    %842 = vmatprep.subr.bf16.mxu0 0
    %843 = vmatpush2.bf16.msra.mxu0 %v809
    %844 = vmatprep.subr.bf16.mxu0 0
    %845 = vmatpush2.bf16.msra.mxu0 %v808
    %846 = vmatprep.subr.bf16.mxu0 0
    %847 = vmatpush2.bf16.msra.mxu0 %v807
    %848 = vmatprep.subr.bf16.mxu0 0
    %849 = vmatpush2.bf16.msra.mxu0 %v806
    %850 = vmatprep.subr.bf16.mxu0 0
    %851 = vmatpush2.bf16.msra.mxu0 %v805
    %852 = vmatprep.subr.bf16.mxu0 0
    %853 = vmatpush2.bf16.msra.mxu0 %v804
    %854 = vmatprep.subr.bf16.mxu0 0
    %855 = vmatpush2.bf16.msra.mxu0 %v803
    %856 = vmatprep.subr.bf16.mxu0 0
    %857 = vmatpush2.bf16.msra.mxu0 %v802
    %858 = vmatprep.mubr.bf16.mxu0 %v690
    %859 = vmatmul.mubr.bf16.gmra.mxu0 %v689
    %v860 = vpop.f32.mrf.mxu0
    %v861 = vadd.f32 %v728, %v860
    %v862 = vpop.f32.mrf.mxu0
    %v863 = vpop.f32.mrf.mxu0
    %v864 = vpop.f32.mrf.mxu0
    %865 = vdwg.mxu0
    %866 = vst [vmem:[%s13] sm:$0x3] %v861
    // Predicated region
    $region78: #{gae_forward.1} parent=1 // pred_check
      _
    $region79: #{gae_forward.1} parent=1 // pred_check_branch
      %868 = sbr.rel (0) target = $region81
    $region80: #{gae_forward.1} parent=1 // pred_region
      _
    $region81: #{gae_forward.1} parent=1 // pred_fallthru
      _
    // Predicated region
    $region82: #{gae_forward.1} parent=1 // pred_check
      _
    $region83: #{gae_forward.1} parent=1 // pred_check_branch
      %870 = sbr.rel (0) target = $region85
    $region84: #{gae_forward.1} parent=1 // pred_region
      _
    $region85: #{gae_forward.1} parent=1 // pred_fallthru
      _
    %871 = vsyncpa [#allocation3], 1
    %872 = vsyncpa [#allocation5], 1
    %873 = vsyncpa [#allocation8], 1
    %874 = vsyncpa [#allocation11], 1

</llo_original>
